<compile_context>
chip_gen: v5e
topology: v5e:2x2
jax: 0.10.0
libtpu: 0.0.40
codegen_flags: <defaults>
</compile_context>

<pallas_src>
import jax
import jax.numpy as jnp
from jax.experimental import pallas as pl
from jax.experimental.pallas import tpu as pltpu


# --------------------------------------------------------------------------
# Small helpers
# --------------------------------------------------------------------------
def _round_up(x, m):
    return ((int(x) + m - 1) // m) * m


def _padded_bytes(rows, cols, esize):
    """Bytes of a (rows, cols) VMEM tile after (8, 128) layout padding."""
    return (_round_up(max(int(rows), 1), 8)
            * _round_up(max(int(cols), 1), 128) * int(esize))


def _vmem_limit_bytes():
    """~80% of the physical VMEM reported by the runtime (v7x: ~51 of 64 MiB,
    v5e/v6e: ~102 of 128 MiB).  Conservative 64 MiB capacity fallback."""
    cap = 64 * 1024 * 1024
    try:
        info = pltpu.get_tpu_info()
        reported = int(getattr(info, "vmem_capacity_bytes", 0) or 0)
        if reported > 0:
            cap = reported
    except Exception:
        pass
    return max(16 * 1024 * 1024, int(cap * 0.8))


# --------------------------------------------------------------------------
# Kernel 1: per-channel image normalization  (x - mean) * (1/std)
# --------------------------------------------------------------------------
def _normalize_kernel(x_ref, mean_ref, inv_std_ref, o_ref):
    x = x_ref[...].astype(jnp.float32)                       # (tr, tc)
    o_ref[...] = ((x - mean_ref[...]) * inv_std_ref[...]).astype(o_ref.dtype)


def normalize_image(x, pixel_mean, pixel_std):
    """x: (N, C, H, W); pixel_mean / pixel_std: (C, 1, 1) buffers.
    NOTE: prefer BenchBasePallas.preprocess_and_resize() when a resize follows
    normalization -- this standalone pass is pure HBM read+write."""
    n, c, h, w = x.shape
    b, hw = n * c, h * w
    x2 = x.reshape(b, hw)                                     # free (contiguous)
    mean_rows = jnp.tile(pixel_mean.reshape(c, 1), (n, 1)).astype(jnp.float32)
    inv_std_rows = jnp.tile((1.0 / pixel_std).reshape(c, 1), (n, 1)).astype(jnp.float32)

    limit = _vmem_limit_bytes()
    es = x.dtype.itemsize
    target = min(8 << 20, limit // 12)      # per-block byte target (~4-8 MiB)

    if hw <= 128:
        tc = hw                              # full minor dim (allowed)
    else:
        cap_c = max(128, ((target // (8 * es)) // 128) * 128)
        tc = min((hw // 128) * 128, cap_c)   # multiple of 128, never > hw
    max_tr = max(8, ((target // (tc * es)) // 8) * 8)
    tr = b if b <= max_tr else max_tr        # multiple of 8 or the full dim

    # keep >=2 grid steps so both v7x TensorCores get work
    if pl.cdiv(b, tr) * pl.cdiv(hw, tc) < 2:
        if hw >= 256:
            tc = _round_up(pl.cdiv(hw, 2), 128)
        elif b >= 16:
            tr = _round_up(pl.cdiv(b, 2), 8)

    grid = (pl.cdiv(b, tr), pl.cdiv(hw, tc))  # ceil-div; boundary blocks masked
    out = pl.pallas_call(
        _normalize_kernel,
        out_shape=jax.ShapeDtypeStruct((b, hw), x.dtype),
        grid=grid,
        in_specs=[
            pl.BlockSpec((tr, tc), lambda i, j: (i, j)),
            pl.BlockSpec((tr, 1), lambda i, j: (i, 0)),
            pl.BlockSpec((tr, 1), lambda i, j: (i, 0)),
        ],
        out_specs=pl.BlockSpec((tr, tc), lambda i, j: (i, j)),
        compiler_params=pltpu.CompilerParams(
            dimension_semantics=("parallel", "parallel"),
            vmem_limit_bytes=limit),
    )(x2, mean_rows, inv_std_rows)
    return out.reshape(n, c, h, w)


# --------------------------------------------------------------------------
# Bilinear weights (align_corners=True), row-stochastic
# --------------------------------------------------------------------------
def _interp_matrix(out_size, in_size):
    if out_size == 1:
        src = jnp.zeros((1,), dtype=jnp.float32)
    else:
        src = jnp.arange(out_size, dtype=jnp.float32) * ((in_size - 1) / (out_size - 1))
    i0 = jnp.clip(jnp.floor(src).astype(jnp.int32), 0, in_size - 1)
    i1 = jnp.clip(i0 + 1, 0, in_size - 1)
    frac = src - i0.astype(jnp.float32)
    rows = jnp.arange(out_size)
    w = jnp.zeros((out_size, in_size), dtype=jnp.float32)
    w = w.at[rows, i0].add(1.0 - frac)
    w = w.at[rows, i1].add(frac)
    return w


# --------------------------------------------------------------------------
# Kernel 2a: fused kron resize for small / lane-sparse sizes.
#   out_flat = (x_flat @ kron(wh, ww)) * scale + bias
# Fully lane-dense input & output blocks, single MXU matmul, zero relayouts.
# --------------------------------------------------------------------------
def _make_kron_kernel(tb, in_hw, out_hw, mxu_dtype):
    def kernel(k_ref, x_ref, scale_ref, bias_ref, o_ref):
        x = x_ref[...].reshape(tb, in_hw).astype(mxu_dtype)   # drop singleton
        r = jnp.dot(x, k_ref[...], preferred_element_type=jnp.float32)
        r = r * scale_ref[...].reshape(tb, 1) + bias_ref[...].reshape(tb, 1)
        o_ref[...] = r.reshape(tb, 1, out_hw).astype(o_ref.dtype)
    return kernel


def _resize_kron(value, b, in_h, in_w, out_h, out_w, scale, bias,
                 compute_dtype, limit):
    in_hw, out_hw = in_h * in_w, out_h * out_w
    in_es = value.dtype.itemsize
    w_es = 2 if compute_dtype == jnp.bfloat16 else 4

    wh = _interp_matrix(out_h, in_h)                          # (out_h, in_h)
    ww = _interp_matrix(out_w, in_w)                          # (out_w, in_w)
    # K[ih*in_w+iw, oh*out_w+ow] = wh[oh, ih] * ww[ow, iw]
    kmat = jnp.einsum("oh,pw->hwop", wh, ww).reshape(in_hw, out_hw)
    kmat = kmat.astype(compute_dtype)
    x3 = value.reshape(b, 1, in_hw)                           # lane-dense slices

    fixed = 2 * _padded_bytes(in_hw, out_hw, w_es)            # double-buffered K

    def step_bytes(tb_):
        return (fixed
                + 2 * tb_ * _padded_bytes(1, in_hw, in_es)    # x blocks
                + 2 * tb_ * _padded_bytes(1, out_hw, in_es)   # out blocks
                + tb_ * _padded_bytes(1, out_hw, 4))          # f32 matmul result

    cap = b if b < 2 else max(1, b // 2)    # >=2 grid steps -> both v7x cores
    cap = min(cap, 512)
    tb = 1
    for t in range(cap, 0, -1):
        if b % t == 0 and step_bytes(t) <= int(limit * 0.6):
            tb = t
            break

    kernel = _make_kron_kernel(tb, in_hw, out_hw, compute_dtype)
    out = pl.pallas_call(
        kernel,
        out_shape=jax.ShapeDtypeStruct((b, 1, out_hw), value.dtype),
        grid=(b // tb,),
        in_specs=[
            pl.BlockSpec((in_hw, out_hw), lambda i: (0, 0)),   # constant: fetched once
            pl.BlockSpec((tb, 1, in_hw), lambda i: (i, 0, 0)),
            pl.BlockSpec((tb, 1, 1), lambda i: (i, 0, 0)),
            pl.BlockSpec((tb, 1, 1), lambda i: (i, 0, 0)),
        ],
        out_specs=pl.BlockSpec((tb, 1, out_hw), lambda i: (i, 0, 0)),
        compiler_params=pltpu.CompilerParams(
            dimension_semantics=("parallel",),
            vmem_limit_bytes=limit),
    )(kmat, x3, scale, bias)
    return out


# --------------------------------------------------------------------------
# Kernel 2b: separable resize for larger sizes.  Both passes are 2-D MXU
# matmuls with the batch folded into M; the inter-pass layout change is a
# swapaxes of the last two dims (XLU).  Optional out_h tiling grid axis.
# --------------------------------------------------------------------------
def _make_separable_kernel(tb, in_h, in_w, t_oh, out_w, h_first, mxu_dtype):
    def kernel(wh_t_ref, wwt_ref, x_ref, scale_ref, bias_ref, o_ref):
        x = x_ref[...].astype(mxu_dtype)                      # (tb, in_h, in_w)
        wh_t = wh_t_ref[...]                                  # (in_h, t_oh)
        wwt = wwt_ref[...]                                    # (in_w, out_w)
        if h_first:
            # H pass: (tb*in_w, in_h) @ (in_h, t_oh)
            xt = jnp.swapaxes(x, 1, 2)                        # (tb, in_w, in_h)
            t = jnp.dot(xt.reshape(tb * in_w, in_h), wh_t,
                        preferred_element_type=jnp.float32)   # (tb*in_w, t_oh)
            t = jnp.swapaxes(t.reshape(tb, in_w, t_oh), 1, 2)  # (tb, t_oh, in_w)
            # W pass: (tb*t_oh, in_w) @ (in_w, out_w)
            r = jnp.dot(t.reshape(tb * t_oh, in_w).astype(mxu_dtype), wwt,
                        preferred_element_type=jnp.float32)   # (tb*t_oh, out_w)
            res = r.reshape(tb, t_oh, out_w)
        else:
            # W pass: (tb*in_h, in_w) @ (in_w, out_w)
            t = jnp.dot(x.reshape(tb * in_h, in_w), wwt,
                        preferred_element_type=jnp.float32)   # (tb*in_h, out_w)
            t = jnp.swapaxes(t.reshape(tb, in_h, out_w), 1, 2)  # (tb, out_w, in_h)
            # H pass: (tb*out_w, in_h) @ (in_h, t_oh)
            r = jnp.dot(t.reshape(tb * out_w, in_h).astype(mxu_dtype), wh_t,
                        preferred_element_type=jnp.float32)   # (tb*out_w, t_oh)
            res = jnp.swapaxes(r.reshape(tb, out_w, t_oh), 1, 2)
        res = res * scale_ref[...] + bias_ref[...]            # (tb,1,1) broadcast
        o_ref[...] = res.astype(o_ref.dtype)
    return kernel


def _resize_separable(value, b, in_h, in_w, out_h, out_w, scale, bias,
                      compute_dtype, limit):
    wh_t = _interp_matrix(out_h, in_h).T.astype(compute_dtype)  # (in_h, out_h)
    wwt = _interp_matrix(out_w, in_w).T.astype(compute_dtype)   # (in_w, out_w)
    x3 = value.reshape(b, in_h, in_w)

    in_es = value.dtype.itemsize
    w_es = 2 if compute_dtype == jnp.bfloat16 else 4
    work = int(limit * 0.6)

    def step_bytes(tb_, t_oh_):
        # padded block footprints (double-buffered) + f32 intermediates
        io = 2 * tb_ * _padded_bytes(in_h, in_w, in_es)
        io += 2 * tb_ * _padded_bytes(t_oh_, out_w, in_es)
        wts = 2 * (_padded_bytes(in_h, t_oh_, w_es)
                   + _padded_bytes(in_w, out_w, w_es))
        inter = 4 * tb_ * (_padded_bytes(in_w, in_h, 1)
                           + _padded_bytes(in_w, t_oh_, 1)
                           + _padded_bytes(t_oh_, in_w, 1)
                           + _padded_bytes(t_oh_, out_w, 1)
                           + _padded_bytes(in_h, out_w, 1)
                           + _padded_bytes(out_w, in_h, 1)
                           + _padded_bytes(out_w, t_oh_, 1))
        return io + wts + inter

    cap = b if b < 2 else max(1, b // 2)     # keep >=2 grid steps (v7x)
    fit_tb = 0
    for t in range(min(cap, 256), 0, -1):
        if b % t == 0 and step_bytes(t, out_h) <= work:
            fit_tb = t
            break

    if fit_tb:
        tb, t_oh, n_oh = fit_tb, out_h, 1
        h_first = (out_h * in_w) <= (in_h * out_w)   # shrinking pass first
    else:
        tb = 1
        if out_h > 128:
            t_oh = max(128, (out_h // 128) * 128)    # minor dim of wh_t block
            while t_oh > 128 and step_bytes(1, t_oh) > work:
                t_oh -= 128
        else:
            t_oh = out_h
            # TODO(synk): add an out_w tiling axis for short-but-extremely-wide
            # outputs that still exceed the VMEM budget at t_oh == out_h.
        n_oh = pl.cdiv(out_h, t_oh)
        h_first = True            # never recompute the W pass per out_h tile

    kernel = _make_separable_kernel(tb, in_h, in_w, t_oh, out_w, h_first,
                                    compute_dtype)
    out = pl.pallas_call(
        kernel,
        out_shape=jax.ShapeDtypeStruct((b, out_h, out_w), value.dtype),
        grid=(b // tb, n_oh),
        in_specs=[
            pl.BlockSpec((in_h, t_oh), lambda i, j: (0, j)),
            pl.BlockSpec((in_w, out_w), lambda i, j: (0, 0)),  # fetched once
            pl.BlockSpec((tb, in_h, in_w), lambda i, j: (i, 0, 0)),
            pl.BlockSpec((tb, 1, 1), lambda i, j: (i, 0, 0)),
            pl.BlockSpec((tb, 1, 1), lambda i, j: (i, 0, 0)),
        ],
        out_specs=pl.BlockSpec((tb, t_oh, out_w), lambda i, j: (i, j, 0)),
        compiler_params=pltpu.CompilerParams(
            dimension_semantics=("parallel", "parallel"),
            vmem_limit_bytes=limit),
    )(wh_t, wwt, x3, scale, bias)
    return out


def bilinear_interpolate(value, size, scale=None, bias=None, compute_dtype=None):
    """F.interpolate(value, size=size, mode='bilinear', align_corners=True) on
    an NCHW tensor, with an optional fused per-slice affine epilogue
    (out = scale * resized + bias)."""
    n, c, in_h, in_w = value.shape
    out_h, out_w = int(size[0]), int(size[1])
    b = n * c
    limit = _vmem_limit_bytes()
    if compute_dtype is None:
        compute_dtype = jnp.bfloat16 if value.dtype == jnp.bfloat16 else jnp.float32
    w_es = 2 if compute_dtype == jnp.bfloat16 else 4

    if scale is None:
        scale = jnp.ones((b, 1, 1), jnp.float32)
    if bias is None:
        bias = jnp.zeros((b, 1, 1), jnp.float32)
    scale = jnp.asarray(scale, jnp.float32).reshape(b, 1, 1)
    bias = jnp.asarray(bias, jnp.float32).reshape(b, 1, 1)

    in_hw, out_hw = in_h * in_w, out_h * out_w
    kron_bytes = _padded_bytes(in_hw, out_hw, w_es)
    # lane-sparse small cases -> fused kron matmul (lane-dense in & out blocks)
    use_kron = (min(in_w, out_w) < 128) and (kron_bytes <= (2 << 20))

    if use_kron:
        out = _resize_kron(value, b, in_h, in_w, out_h, out_w,
                           scale, bias, compute_dtype, limit)
    else:
        out = _resize_separable(value, b, in_h, in_w, out_h, out_w,
                                scale, bias, compute_dtype, limit)
    return out.reshape(n, c, out_h, out_w)


# --------------------------------------------------------------------------
# Thin BenchBase-like wrapper (only the concrete pieces of the module)
# --------------------------------------------------------------------------
class BenchBasePallas:
    def __init__(self, pixel_mean, pixel_std):
        # registered buffers, shape (C, 1, 1) like .view(-1, 1, 1) in PyTorch
        self.pixel_mean = jnp.asarray(pixel_mean, jnp.float32).reshape(-1, 1, 1)
        self.pixel_std = jnp.asarray(pixel_std, jnp.float32).reshape(-1, 1, 1)
        assert self.pixel_mean.shape == self.pixel_std.shape

    def preprocess_image(self, images):
        return normalize_image(images, self.pixel_mean, self.pixel_std)

    def downsample(self, value, size):
        return bilinear_interpolate(value, size)

    def upsample(self, value, size):
        return bilinear_interpolate(value, size)

    def preprocess_and_resize(self, images, size):
        """Fused (x - mean)/std + bilinear resize in a single memory pass.
        Valid because the align_corners bilinear weights are row-stochastic."""
        n, c = images.shape[0], images.shape[1]
        inv_std = (1.0 / self.pixel_std).reshape(c, 1, 1)
        neg_mean_over_std = (-self.pixel_mean / self.pixel_std).reshape(c, 1, 1)
        scale = jnp.tile(inv_std, (n, 1, 1)).astype(jnp.float32)
        bias = jnp.tile(neg_mean_over_std, (n, 1, 1)).astype(jnp.float32)
        return bilinear_interpolate(images, size, scale=scale, bias=bias)


# --------------------------------------------------------------------------
# Pure-JAX reference for verification
# --------------------------------------------------------------------------
def _ref_bilinear(value, size):
    n, c, in_h, in_w = value.shape
    out_h, out_w = size

    def coords(o, i):
        if o == 1:
            return jnp.zeros((1,), jnp.float32)
        return jnp.arange(o, dtype=jnp.float32) * ((i - 1) / (o - 1))

    sy, sx = coords(out_h, in_h), coords(out_w, in_w)
    y0 = jnp.clip(jnp.floor(sy).astype(jnp.int32), 0, in_h - 1)
    y1 = jnp.clip(y0 + 1, 0, in_h - 1)
    x0 = jnp.clip(jnp.floor(sx).astype(jnp.int32), 0, in_w - 1)
    x1 = jnp.clip(x0 + 1, 0, in_w - 1)
    fy = (sy - y0.astype(jnp.float32))[None, None, :, None]
    fx = (sx - x0.astype(jnp.float32))[None, None, None, :]
    v00 = value[:, :, y0][:, :, :, x0]
    v01 = value[:, :, y0][:, :, :, x1]
    v10 = value[:, :, y1][:, :, :, x0]
    v11 = value[:, :, y1][:, :, :, x1]
    top = v00 * (1 - fx) + v01 * fx
    bot = v10 * (1 - fx) + v11 * fx
    return top * (1 - fy) + bot * fy


if __name__ == "__main__":
    key = jax.random.PRNGKey(0)
    k1, k2 = jax.random.split(key)

    # small NCHW image batch (exercises the fused-kron lane-dense path)
    N, C, H, W = 2, 4, 16, 16
    x = jax.random.uniform(k1, (N, C, H, W), jnp.float32) * 255.0

    pixel_mean = [103.530, 116.280, 123.675, 110.000]
    pixel_std = [57.375, 57.120, 58.395, 60.000]
    model = BenchBasePallas(pixel_mean, pixel_std)

    # pixel normalization
    normed = jax.block_until_ready(model.preprocess_image(x))
    ref_normed = (x - model.pixel_mean[None]) / model.pixel_std[None]
    assert jnp.allclose(normed, ref_normed, atol=1e-5, rtol=1e-5)

    # upsample 16x16 -> 32x32 (bilinear, align_corners=True)
    up = jax.block_until_ready(model.upsample(x, (32, 32)))
    assert jnp.allclose(up, _ref_bilinear(x, (32, 32)), atol=1e-3, rtol=1e-5)

    # downsample 16x16 -> 8x8
    down = jax.block_until_ready(model.downsample(x, (8, 8)))
    assert jnp.allclose(down, _ref_bilinear(x, (8, 8)), atol=1e-3, rtol=1e-5)

    # asymmetric resize 16x16 -> 24x8
    asym = jax.block_until_ready(model.downsample(x, (24, 8)))
    assert jnp.allclose(asym, _ref_bilinear(x, (24, 8)), atol=1e-3, rtol=1e-5)

    # fused normalize + upsample (single memory pass)
    fused = jax.block_until_ready(model.preprocess_and_resize(x, (32, 32)))
    ref_fused = _ref_bilinear(ref_normed, (32, 32))
    assert jnp.allclose(fused, ref_fused, atol=1e-4, rtol=1e-4)

    # lane-aligned shape exercising the separable (two 2-D MXU matmuls) path:
    #   H-first branch (upsample both dims) ...
    x_big = jax.random.uniform(k2, (1, 2, 32, 128), jnp.float32) * 255.0
    up2 = jax.block_until_ready(model.upsample(x_big, (64, 256)))
    assert jnp.allclose(up2, _ref_bilinear(x_big, (64, 256)), atol=5e-3, rtol=1e-5)
    #   ... and the W-first branch (wide -> tall)
    mix2 = jax.block_until_ready(model.downsample(x_big, (128, 64)))
    assert jnp.allclose(mix2, _ref_bilinear(x_big, (128, 64)), atol=5e-3, rtol=1e-5)

    print("KERNEL_OK")
</pallas_src>

<mosaic_0001>
module attributes {stable_mosaic.version = 11 : i64} {
  func.func @_normalize_kernel(%arg0: i32, %arg1: i32, %arg2: memref<8x128xf32, #tpu.memory_space<vmem>>, %arg3: memref<8x1xf32, #tpu.memory_space<vmem>>, %arg4: memref<8x1xf32, #tpu.memory_space<vmem>>, %arg5: memref<8x128xf32, #tpu.memory_space<vmem>>) attributes {dimension_semantics = [#tpu.dimension_semantics<parallel>, #tpu.dimension_semantics<parallel>], iteration_bounds = array<i64: 1, 2>, scalar_prefetch = 0 : i64, scratch_operands = 0 : i64, tpu.core_type = #tpu.core_type<tc>, window_params = [{transform_indices = @transform_0, window_bounds = array<i64: 8, 128>}, {transform_indices = @transform_1, window_bounds = array<i64: 8, 1>}, {transform_indices = @transform_2, window_bounds = array<i64: 8, 1>}, {transform_indices = @transform_3, window_bounds = array<i64: 8, 128>}]} {
    %c0 = arith.constant 0 : index
    %c0_0 = arith.constant 0 : index
    %0 = vector.load %arg2[%c0, %c0_0] : memref<8x128xf32, #tpu.memory_space<vmem>>, vector<8x128xf32>
    %c0_1 = arith.constant 0 : index
    %c0_2 = arith.constant 0 : index
    %1 = vector.load %arg3[%c0_1, %c0_2] : memref<8x1xf32, #tpu.memory_space<vmem>>, vector<8x1xf32>
    %2 = vector.broadcast %1 : vector<8x1xf32> to vector<8x128xf32>
    %3 = arith.subf %0, %2 : vector<8x128xf32>
    %c0_3 = arith.constant 0 : index
    %c0_4 = arith.constant 0 : index
    %4 = vector.load %arg4[%c0_3, %c0_4] : memref<8x1xf32, #tpu.memory_space<vmem>>, vector<8x1xf32>
    %5 = vector.broadcast %4 : vector<8x1xf32> to vector<8x128xf32>
    %6 = arith.mulf %3, %5 : vector<8x128xf32>
    %c0_5 = arith.constant 0 : index
    %c0_6 = arith.constant 0 : index
    %7 = vector.load %arg5[%c0_5, %c0_6] : memref<8x128xf32, #tpu.memory_space<vmem>>, vector<8x128xf32>
    tpu.vector_store %arg5[%c0_5, %c0_6], %6 {strides = array<i32>} : memref<8x128xf32, #tpu.memory_space<vmem>>, vector<8x128xf32>,
    return
  }
  func.func @transform_0(%arg0: i32, %arg1: i32) -> (i32, i32) {
    %c0_i32 = arith.constant 0 : i32
    return %arg0, %arg1 : i32, i32
  }
  func.func @transform_1(%arg0: i32, %arg1: i32) -> (i32, i32) {
    %c0_i32 = arith.constant 0 : i32
    %c0_i32_0 = arith.constant 0 : i32
    return %arg0, %c0_i32 : i32, i32
  }
  func.func @transform_2(%arg0: i32, %arg1: i32) -> (i32, i32) {
    %c0_i32 = arith.constant 0 : i32
    %c0_i32_0 = arith.constant 0 : i32
    return %arg0, %c0_i32 : i32, i32
  }
  func.func @transform_3(%arg0: i32, %arg1: i32) -> (i32, i32) {
    %c0_i32 = arith.constant 0 : i32
    return %arg0, %arg1 : i32, i32
  }
}

</mosaic_0001>

<llo_original>
// kernel: tpu_custom_call.1
$region0: #{tpu_custom_call.1}
  #allocation0 [shape = 'u32[]', space=smem, size = 0x4, offset = 0x4, fixed_abs, tag = 'smem constant byte address 0x4 - core index']
  #allocation1 [shape = 'u32[72,128]{1,0:T(1,128)}', space=vmem, size = 0x9000, scoped, tag = 'internal scratch']
  %s0 = inlined_call_operand.vmem [shape: f32[8,256], index: 0, kind: input, shape index: {}]
  %s1 = inlined_call_operand.vmem [shape: f32[8,1], index: 1, kind: input, shape index: {}]
  %s2 = inlined_call_operand.vmem [shape: f32[8,1], index: 2, kind: input, shape index: {}]
  %s3 = inlined_call_operand.hbm [shape: f32[8,256], index: 3, kind: output, shape index: {}]
  %s4 = sld [smem:[#allocation0]]
  $region45: #{tpu_custom_call.1} parent=0
    _
  %s6 = ssub.s32 1, %s4
  %s7 = scalar_select 0, %s6, %s4
  $region1: #{tpu_custom_call.1} parent=0
    #allocation2 [shape = 'u8[8192]{0}', space=vmem, size = 0x2000, scoped, tag = 'output window, operand 0']
    #allocation3 [shape = 's32[2]{0}', space=sflag, size = 0x8, scoped, tag = 'scoped memory for tpu_custom_call.1']
    %8 = vsyncpa [#allocation3], 0
    %s9 = scalar_lea.sflag [#allocation3], 1
    %10 = vsyncpa %s9, 0
    loop: start=0, step=1, limit=4
    $region2: #{tpu_custom_call.1} parent=1 // loop_pre_header
      _
    $region3: #{tpu_custom_call.1} parent=1 // loop_header
      %s12 = sphi 0, %s16
      %p13 = scmp.ge.s32.totalorder %s12, 4
      %s19 = sphi 0, %s31
      %s20 = sphi 0, %s27
      %s21 = sphi 0, %s19
      %s22 = sphi 0, %s20
      %s23 = sphi 0, %s21
      %s24 = sphi 0, %s22
      %s36 = sphi 0, %s38
      %s39 = sphi 0, %s36
      %s40 = sphi 0, %s39
      %s56 = sphi 0, %s40
      %s62 = sphi 0, %s64
      %s65 = sphi 0, %s62
      %s66 = sphi 0, %s65
      %s82 = sphi 0, %s66
      %s88 = sphi 0, %s90
      %s91 = sphi 0, %s88
      %s92 = sphi 0, %s91
      %s108 = sphi 0, %s92
      %s116 = sphi 0, %s118
      %s119 = sphi 0, %s116
      %s120 = sphi 0, %s119
      %s136 = sphi 0, %s120
    $region4: #{tpu_custom_call.1} parent=1 // loop_header_branch
      %15 = sbr.rel (%p13) target = $region8
    $region5: #{tpu_custom_call.1} parent=1 // loop_body
      %s17 = ssub.s32 %s12, 1
      %s18 = ssub.s32 %s12, 2
      %s25 = sadd.s32 1, %s20
      %p26 = scmp.ge.s32.totalorder %s25, 2
      %s27 = scalar_select %p26, 0, %s25
      %s28 = sadd.s32 1, %s19
      %s29 = scalar_select %p26, %s28, %s19
      %p30 = scmp.ge.s32.totalorder %s29, 1
      %s31 = scalar_select %p30, 0, %s29
      %s32 = ssub.s32 %s19, %s31
      %s33 = ssub.s32 %s20, %s27
      %s34 = sor.u32 %s32, %s33
      %p35 = scmp.eq.s32.totalorder %s34, 0
      %s37 = sadd.s32 %s36, 1
      %s38 = scalar_select %p35, %s36, %s37
      %p41 = pneg %p35
      %p42 = scmp.eq.s32.totalorder %s12, 1
      %p43 = por %p41, %p42
      %p44 = scmp.ne.s32.totalorder %s36, %s39
      %p45 = scmp.eq.s32.totalorder %s12, 0
      %p46 = por %p44, %p45
      %p47 = scmp.ne.s32.totalorder %s36, %s39
      %p48 = scmp.eq.s32.totalorder %s17, 1
      %p49 = por %p47, %p48
      %p50 = scmp.ne.s32.totalorder %s39, %s40
      %p51 = scmp.eq.s32.totalorder %s17, 0
      %p52 = por %p50, %p51
      %p53 = scmp.ne.s32.totalorder %s39, %s40
      %p54 = scmp.eq.s32.totalorder %s18, 1
      %p55 = por %p53, %p54
      %p57 = scmp.ne.s32.totalorder %s40, %s56
      %p58 = scmp.eq.s32.totalorder %s18, 0
      %p59 = por %p57, %p58
      %s60 = ssub.s32 %s19, %s31
      %p61 = scmp.eq.s32.totalorder %s60, 0
      %s63 = sadd.s32 %s62, 1
      %s64 = scalar_select %p61, %s62, %s63
      %p67 = pneg %p61
      %p68 = scmp.eq.s32.totalorder %s12, 1
      %p69 = por %p67, %p68
      %p70 = scmp.ne.s32.totalorder %s62, %s65
      %p71 = scmp.eq.s32.totalorder %s12, 0
      %p72 = por %p70, %p71
      %p73 = scmp.ne.s32.totalorder %s62, %s65
      %p74 = scmp.eq.s32.totalorder %s17, 1
      %p75 = por %p73, %p74
      %p76 = scmp.ne.s32.totalorder %s65, %s66
      %p77 = scmp.eq.s32.totalorder %s17, 0
      %p78 = por %p76, %p77
      %p79 = scmp.ne.s32.totalorder %s65, %s66
      %p80 = scmp.eq.s32.totalorder %s18, 1
      %p81 = por %p79, %p80
      %p83 = scmp.ne.s32.totalorder %s66, %s82
      %p84 = scmp.eq.s32.totalorder %s18, 0
      %p85 = por %p83, %p84
      %s86 = ssub.s32 %s19, %s31
      %p87 = scmp.eq.s32.totalorder %s86, 0
      %s89 = sadd.s32 %s88, 1
      %s90 = scalar_select %p87, %s88, %s89
      %p93 = pneg %p87
      %p94 = scmp.eq.s32.totalorder %s12, 1
      %p95 = por %p93, %p94
      %p96 = scmp.ne.s32.totalorder %s88, %s91
      %p97 = scmp.eq.s32.totalorder %s12, 0
      %p98 = por %p96, %p97
      %p99 = scmp.ne.s32.totalorder %s88, %s91
      %p100 = scmp.eq.s32.totalorder %s17, 1
      %p101 = por %p99, %p100
      %p102 = scmp.ne.s32.totalorder %s91, %s92
      %p103 = scmp.eq.s32.totalorder %s17, 0
      %p104 = por %p102, %p103
      %p105 = scmp.ne.s32.totalorder %s91, %s92
      %p106 = scmp.eq.s32.totalorder %s18, 1
      %p107 = por %p105, %p106
      %p109 = scmp.ne.s32.totalorder %s92, %s108
      %p110 = scmp.eq.s32.totalorder %s18, 0
      %p111 = por %p109, %p110
      %s112 = ssub.s32 %s19, %s31
      %s113 = ssub.s32 %s20, %s27
      %s114 = sor.u32 %s112, %s113
      %p115 = scmp.eq.s32.totalorder %s114, 0
      %s117 = sadd.s32 %s116, 1
      %s118 = scalar_select %p115, %s116, %s117
      %p121 = pneg %p115
      %p122 = scmp.eq.s32.totalorder %s12, 1
      %p123 = por %p121, %p122
      %p124 = scmp.ne.s32.totalorder %s116, %s119
      %p125 = scmp.eq.s32.totalorder %s12, 0
      %p126 = por %p124, %p125
      %p127 = scmp.ne.s32.totalorder %s116, %s119
      %p128 = scmp.eq.s32.totalorder %s17, 1
      %p129 = por %p127, %p128
      %p130 = scmp.ne.s32.totalorder %s119, %s120
      %p131 = scmp.eq.s32.totalorder %s17, 0
      %p132 = por %p130, %p131
      %p133 = scmp.ne.s32.totalorder %s119, %s120
      %p134 = scmp.eq.s32.totalorder %s18, 1
      %p135 = por %p133, %p134
      %p137 = scmp.ne.s32.totalorder %s120, %s136
      %p138 = scmp.eq.s32.totalorder %s18, 0
      %p139 = por %p137, %p138
      %p140 = scmp.le.s32.totalorder 1, %s12
      %p141 = scmp.lt.s32.totalorder %s12, 3
      %p142 = pnand %p140, %p141
      %p143 = pneg %p142
      // Predicated region
      $region9: #{tpu_custom_call.1} parent=5 // pred_check
        _
      $region10: #{tpu_custom_call.1} parent=5 // pred_check_branch
        %145 = sbr.rel (%p142) target = $region12
      $region11: #{tpu_custom_call.1} parent=5 // pred_region
        %s146 = ssub.s32 %s12, 1
        // Predicated region
        $region13: #{tpu_custom_call.1} parent=11 // pred_check
          %p147 = pneg %p78
        $region14: #{tpu_custom_call.1} parent=11 // pred_check_branch
          %149 = sbr.rel (%p147) target = $region16
        $region15: #{tpu_custom_call.1} parent=11 // pred_region
          %p150 = scmp.lt.s32.totalorder %s21, 0
          %s151 = scalar_select %p150, %s21, 0
          %s152 = smul.addr %s151, 8
          %s153 = scalar_lea.vmem %s1, %s152
        $region16: #{tpu_custom_call.1} parent=11 // pred_fallthru
          _
        // Predicated region
        $region17: #{tpu_custom_call.1} parent=11 // pred_check
          %p154 = pneg %p104
        $region18: #{tpu_custom_call.1} parent=11 // pred_check_branch
          %156 = sbr.rel (%p154) target = $region20
        $region19: #{tpu_custom_call.1} parent=11 // pred_region
          %p157 = scmp.lt.s32.totalorder %s21, 0
          %s158 = scalar_select %p157, %s21, 0
          %s159 = smul.addr %s158, 8
          %s160 = scalar_lea.vmem %s2, %s159
        $region20: #{tpu_custom_call.1} parent=11 // pred_fallthru
          _
      $region12: #{tpu_custom_call.1} parent=5 // pred_fallthru
        _
      %p161 = scmp.lt.s32.totalorder %s12, 2
      // Predicated region
      $region21: #{tpu_custom_call.1} parent=5 // pred_check
        %p162 = pneg %p161
      $region22: #{tpu_custom_call.1} parent=5 // pred_check_branch
        %164 = sbr.rel (%p162) target = $region24
      $region23: #{tpu_custom_call.1} parent=5 // pred_region
        // Predicated region
        $region25: #{tpu_custom_call.1} parent=23 // pred_check
          %p165 = pneg %p46
        $region26: #{tpu_custom_call.1} parent=23 // pred_check_branch
          %167 = sbr.rel (%p165) target = $region28
        $region27: #{tpu_custom_call.1} parent=23 // pred_region
          %p168 = scmp.lt.s32.totalorder %s19, 0
          %s169 = scalar_select %p168, %s19, 0
          %p170 = scmp.lt.s32.totalorder %s20, 1
          %s171 = scalar_select %p170, %s20, 1
          %s172 = smul.addr %s169, 2
          %s173 = sadd.s32 %s171, %s172
          %s174 = smul.addr %s173, 8
          %s175 = scalar_lea.vmem %s0, %s174
        $region28: #{tpu_custom_call.1} parent=23 // pred_fallthru
          _
      $region24: #{tpu_custom_call.1} parent=5 // pred_fallthru
        _
      %p176 = scmp.le.s32.totalorder 1, %s12
      %p177 = scmp.lt.s32.totalorder %s12, 3
      %p178 = pnand %p176, %p177
      %p179 = pneg %p178
      // Predicated region
      $region29: #{tpu_custom_call.1} parent=5 // pred_check
        _
      $region30: #{tpu_custom_call.1} parent=5 // pred_check_branch
        %181 = sbr.rel (%p178) target = $region32
      $region31: #{tpu_custom_call.1} parent=5 // pred_region
        %s182 = ssub.s32 %s12, 1
        %p183 = scmp.lt.s32.totalorder %s21, 0
        %s184 = scalar_select %p183, %s21, 0
        %p185 = scmp.lt.s32.totalorder %s22, 1
        %s186 = scalar_select %p185, %s22, 1
        %s187 = smul.addr %s184, 2
        %s188 = sadd.s32 %s186, %s187
        %s189 = smul.addr %s188, 8
        %s190 = scalar_lea.vmem %s0, %s189
        %p191 = pneg %p52
        %p192 = pneg %p49
        %p193 = scmp.lt.s32.totalorder %s21, 0
        %s194 = scalar_select %p193, %s21, 0
        %s195 = smul.addr %s194, 8
        %s196 = scalar_lea.vmem %s1, %s195
        %p197 = pneg %p78
        %p198 = pneg %p75
        %p199 = scmp.lt.s32.totalorder %s21, 0
        %s200 = scalar_select %p199, %s21, 0
        %s201 = smul.addr %s200, 8
        %s202 = scalar_lea.vmem %s2, %s201
        %p203 = pneg %p104
        %p204 = pneg %p101
        %p205 = pneg %p132
        %p206 = pneg %p129
        %s207 = sand.u32 %s119, 1
        %s208 = scalar_lea.sflag [#allocation3], %s207
        %s209 = sand.u32 %s119, 1
        %s210 = smul.addr %s209, 8
        %s211 = scalar_lea.vmem [#allocation2], %s210
        %p212 = scmp.lt.s32.totalorder %s21, 0
        %s213 = scalar_select %p212, %s21, 0
        %p214 = scmp.lt.s32.totalorder %s22, 1
        %s215 = scalar_select %p214, %s22, 1
        %s216 = smul.addr %s213, 2
        %s217 = sadd.s32 %s215, %s216
        %s218 = smul.addr %s217, 8
        %s219 = scalar_lea.vmem %s0, %s218
        %p220 = scmp.lt.s32.totalorder %s21, 0
        %s221 = scalar_select %p220, %s21, 0
        %s222 = smul.addr %s221, 8
        %s223 = scalar_lea.vmem %s1, %s222
        %p224 = scmp.lt.s32.totalorder %s21, 0
        %s225 = scalar_select %p224, %s21, 0
        %s226 = smul.addr %s225, 8
        %s227 = scalar_lea.vmem %s2, %s226
        %v228 = vld [vmem:[%s219] sm:$0xff]
        %v229 = vld [vmem:[%s223] sm:$0xff]
        %231 = vset.pattern.permute.xlu0 0
        %232 = vperm.xlu0 %231, %v229
        %v233 = vpop.permute.xlu0 %232
        %v235 = vsub.f32 %v228, %v233
        %v236 = vld [vmem:[%s227] sm:$0xff]
        %238 = vset.pattern.permute.xlu0 0
        %239 = vperm.xlu0 %238, %v236
        %v240 = vpop.permute.xlu0 %239
        %v242 = vmul.f32 %v235, %v240
        %243 = vst [vmem:[%s211] sm:$0xff] %v242
        %s244 = sand.u32 %s119, 1
        %s245 = scalar_lea.sflag [#allocation3], %s244
        %s246 = sand.u32 %s119, 1
        %s247 = smul.addr %s246, 8
        %s248 = scalar_lea.vmem [#allocation2], %s247
        // Predicated region
        $region33: #{tpu_custom_call.1} parent=31 // pred_check
          %p249 = pneg %p129
        $region34: #{tpu_custom_call.1} parent=31 // pred_check_branch
          %251 = sbr.rel (%p249) target = $region36
        $region35: #{tpu_custom_call.1} parent=31 // pred_region
          %253 = vsyncadd %s245, 0
          %s254 = smul.addr %s21, 2
          %s255 = sadd.s32 %s22, %s254
          %s256 = smul.addr %s255, 8
          %s257 = scalar_lea.hbm %s3, %s256
          %s259 = sshll.u32 %s248, 4
          %s260 = int_to_ptr.vmem [resolvable:$true] %s259
          %s261 = sshll.u32 %s257, 4
          %s262 = int_to_ptr.hbm [resolvable:$true] %s261
          %264 = dma.vmem_to_hbm [thread:$0]  %s260, 128, %s262, %s245
        $region36: #{tpu_custom_call.1} parent=31 // pred_fallthru
          _
      $region32: #{tpu_custom_call.1} parent=5 // pred_fallthru
        _
      %p265 = scmp.le.s32.totalorder 2, %s12
      // Predicated region
      $region37: #{tpu_custom_call.1} parent=5 // pred_check
        %p266 = pneg %p265
      $region38: #{tpu_custom_call.1} parent=5 // pred_check_branch
        %268 = sbr.rel (%p266) target = $region40
      $region39: #{tpu_custom_call.1} parent=5 // pred_region
        %s269 = ssub.s32 %s12, 2
        // Predicated region
        $region41: #{tpu_custom_call.1} parent=39 // pred_check
          %p270 = pneg %p135
        $region42: #{tpu_custom_call.1} parent=39 // pred_check_branch
          %272 = sbr.rel (%p270) target = $region44
        $region43: #{tpu_custom_call.1} parent=39 // pred_region
          %s273 = sand.u32 %s120, 1
          %s274 = scalar_lea.sflag [#allocation3], %s273
          %s275 = sand.u32 %s120, 1
          %s276 = smul.addr %s275, 8
          %s277 = scalar_lea.vmem [#allocation2], %s276
          %279 = dma.done %s274, 128
        $region44: #{tpu_custom_call.1} parent=39 // pred_fallthru
          _
      $region40: #{tpu_custom_call.1} parent=5 // pred_fallthru
        _
    $region6: #{tpu_custom_call.1} parent=1 // loop_footer
      %s16 = sadd.s32 1, %s12
    $region7: #{tpu_custom_call.1} parent=1 // loop_footer_branch
      %11 = sbr.rel target = $region3
    $region8: #{tpu_custom_call.1} parent=1 // loop_exit
      _
    %280 = vsyncpa [#allocation3], 1
    %s281 = scalar_lea.sflag [#allocation3], 1
    %282 = vsyncpa %s281, 1

</llo_original>
